<compile_context>
chip_gen: v7x
topology: tpu7x:2x2x1
jax: 0.10.0
libtpu: 0.0.40
codegen_flags: <defaults>
</compile_context>

<pallas_src>
import math
from functools import partial

import jax
import jax.numpy as jnp
from jax.experimental import pallas as pl
from jax.experimental.pallas import tpu as pltpu


def _round_up(x, m):
    return (x + m - 1) // m * m


def _time_embedding_kernel(t_ref, w1_ref, b1_ref, w2_ref, b2_ref, out_ref,
                           *, half_dim, emb_scale):
    """One batch tile of the full TimeEmbedding forward.

    t_ref:   [TB, 1]            f32 timesteps
    w1_ref:  [2*half_dim, C]    lin1 weight, stored as W.T (in, out)
    b1_ref:  [1, C]             f32
    w2_ref:  [C, C]             lin2 weight, stored as W.T
    b2_ref:  [1, C]             f32
    out_ref: [TB, C]
    """
    t = t_ref[...]                                            # [TB, 1]

    # Sinusoidal embedding built fully in-kernel (no freq-table input).
    # Lane j in [0, 2*half_dim): frequency index = j mod half_dim; lanes
    # [0, half_dim) carry sin(t*f_k), lanes [half_dim, 2*half_dim) carry
    # cos(t*f_k) = sin(t*f_k + pi/2). Folding the pi/2 phase into the same
    # iota/where gives the whole embedding with ONE sin pass on the EUP:
    # exactly concat([sin(t*f), cos(t*f)], axis=1).
    j = jax.lax.broadcasted_iota(jnp.int32, (1, 2 * half_dim), 1)
    is_sin = j < half_dim                                     # [1, 2*half_dim]
    k = jnp.where(is_sin, j, j - half_dim).astype(jnp.float32)
    freq = jnp.exp(k * (-emb_scale))                          # [1, 2*half_dim]
    phase = jnp.where(is_sin, 0.0, 0.5 * math.pi).astype(jnp.float32)

    emb = jnp.sin(t * freq + phase)                           # [TB, 2*half_dim]

    # lin1: single K = 2*half_dim MXU dot, f32 accumulation.
    h = jnp.dot(emb.astype(w1_ref.dtype), w1_ref[...],
                preferred_element_type=jnp.float32) + b1_ref[...]   # [TB, C]

    # Swish: x * sigmoid(x), with sigmoid(x) = 0.5*(1 + tanh(x/2)) so the
    # activation costs a single EUP tanh per element (no exp + reciprocal).
    h = h * (0.5 * (jnp.tanh(0.5 * h) + 1.0))

    # lin2.
    out = jnp.dot(h.astype(w2_ref.dtype), w2_ref[...],
                  preferred_element_type=jnp.float32) + b2_ref[...]  # [TB, C]
    out_ref[...] = out.astype(out_ref.dtype)


def _pick_batch_tile(B, max_block_b):
    """Batch tile: multiple of 8 sublanes, capped at max_block_b.

    If the whole (large) batch would fit a single block, split it in two so
    the ("parallel",) grid axis can feed both of v7x's TensorCores.
    """
    B8 = _round_up(B, 8)
    TB = min(_round_up(max_block_b, 8), B8)
    if TB == B8 and B8 >= 2048:
        TB = _round_up((B8 + 1) // 2, 8)
    return TB


def time_embedding(t, w1, b1, w2, b2, n_channels, *,
                   weight_dtype=jnp.float32, out_dtype=jnp.float32,
                   max_block_b=4096):
    """t: [B] float32 timesteps. Returns [B, n_channels] in out_dtype.

    w1: [n_channels//4, n_channels]  (PyTorch lin1.weight.T)
    b1: [n_channels]
    w2: [n_channels, n_channels]     (PyTorch lin2.weight.T)
    b2: [n_channels]

    Large-B configuration: pass out_dtype=jnp.bfloat16 (the kernel is HBM
    writeback bound above a few thousand rows) and, on v5e,
    weight_dtype=jnp.bfloat16. Note the bf16 weight path also casts the
    activations feeding each dot to bf16 (f32 accumulation).
    """
    assert n_channels >= 16, "n_channels must be >= 16 (half_dim >= 2)"
    B = t.shape[0]
    C = n_channels
    half_dim = C // 8
    emb_scale = math.log(10000.0) / (half_dim - 1)

    TB = _pick_batch_tile(B, max_block_b)
    num_blocks = pl.cdiv(B, TB)

    t2 = t.reshape(B, 1).astype(jnp.float32)
    w1c = w1.astype(weight_dtype)
    w2c = w2.astype(weight_dtype)
    b1_2 = b1.reshape(1, C).astype(jnp.float32)
    b2_2 = b2.reshape(1, C).astype(jnp.float32)

    resident = lambda shape: pl.BlockSpec(shape, lambda i: (0,) * len(shape))

    w_isz = jnp.dtype(weight_dtype).itemsize
    out_isz = jnp.dtype(out_dtype).itemsize
    weight_bytes = (w1c.size + w2c.size) * w_isz + (b1_2.size + b2_2.size) * 4

    # Scoped-VMEM footprint estimate: double-buffered t (lane-padded to 128
    # lanes -> TB*512 B per buffer) and out blocks, f32 intermediates, weights,
    # plus headroom. Raise the limit only when we exceed the most conservative
    # (v5e) 16 MiB scoped default; stays well under v7x's 64 MiB physical VMEM.
    vmem_est = (2 * TB * 128 * 4           # t blocks (lane-padded), x2 buffers
                + 2 * TB * C * out_isz     # out blocks, x2 buffers
                + 4 * TB * C * 4           # f32 intermediates (emb/h/out)
                + weight_bytes
                + (2 << 20))               # headroom
    vmem_limit = None
    if vmem_est > (16 << 20):
        vmem_limit = min(_round_up(vmem_est, 1 << 20), 40 << 20)

    cost = pl.CostEstimate(
        flops=2 * B * (2 * half_dim * C + C * C) + 6 * B * C,
        transcendentals=B * (2 * half_dim + C),       # one sin + one tanh pass
        bytes_accessed=weight_bytes + B * 4 + B * C * out_isz,
    )

    kernel = partial(_time_embedding_kernel,
                     half_dim=half_dim, emb_scale=emb_scale)

    out = pl.pallas_call(
        kernel,
        out_shape=jax.ShapeDtypeStruct((B, C), out_dtype),
        grid=(num_blocks,),
        in_specs=[
            pl.BlockSpec((TB, 1), lambda i: (i, 0)),   # t: tiled over batch
            resident(w1c.shape),                       # weights: VMEM-resident
            resident(b1_2.shape),
            resident(w2c.shape),
            resident(b2_2.shape),
        ],
        out_specs=pl.BlockSpec((TB, C), lambda i: (i, 0)),
        compiler_params=pltpu.CompilerParams(
            dimension_semantics=("parallel",),
            vmem_limit_bytes=vmem_limit),
        cost_estimate=cost,
    )(t2, w1c, b1_2, w2c, b2_2)

    return out


def reference_time_embedding(t, w1, b1, w2, b2, n_channels):
    """Pure-JAX reference matching the PyTorch forward exactly."""
    half_dim = n_channels // 8
    emb_scale = math.log(10000.0) / (half_dim - 1)
    freq = jnp.exp(jnp.arange(half_dim, dtype=jnp.float32) * -emb_scale)
    emb = t[:, None] * freq[None, :]
    emb = jnp.concatenate([jnp.sin(emb), jnp.cos(emb)], axis=1)
    h = emb @ w1 + b1
    h = h * jax.nn.sigmoid(h)
    return h @ w2 + b2


if __name__ == "__main__":
    # Small shapes consistent with the module: n_channels >= 16 required.
    B = 8
    n_channels = 128                       # lin1: 32 -> 128, lin2: 128 -> 128
    in1 = n_channels // 4                  # 32

    key = jax.random.PRNGKey(0)
    k_t, k_w1, k_b1, k_w2, k_b2 = jax.random.split(key, 5)

    # Deterministic synthetic parameters (stored as [in, out], i.e. W.T).
    w1 = jax.random.normal(k_w1, (in1, n_channels), jnp.float32) * 0.05
    b1 = jax.random.normal(k_b1, (n_channels,), jnp.float32) * 0.05
    w2 = jax.random.normal(k_w2, (n_channels, n_channels), jnp.float32) * 0.05
    b2 = jax.random.normal(k_b2, (n_channels,), jnp.float32) * 0.05

    # Example timesteps.
    t = jax.random.uniform(k_t, (B,), jnp.float32, minval=0.0, maxval=1000.0)

    ref = reference_time_embedding(t, w1, b1, w2, b2, n_channels)

    # 1) f32 path. Slightly relaxed tolerance: the single-sin phase trick
    #    (cos(x) = sin(x + pi/2)) and in-kernel freq-exp differ from the
    #    reference by ~1e-4-scale f32 rounding at |t| ~ 1000.
    out = jax.block_until_ready(time_embedding(t, w1, b1, w2, b2, n_channels))
    assert out.shape == (B, n_channels)
    assert jnp.allclose(out, ref, atol=2e-4, rtol=2e-4), "f32 mismatch vs reference"

    # 2) bf16-matmul path (bf16 weights AND activations into each dot, f32
    #    accumulation) — relaxed tolerance.
    out_bf16w = jax.block_until_ready(
        time_embedding(t, w1, b1, w2, b2, n_channels,
                       weight_dtype=jnp.bfloat16))
    assert jnp.allclose(out_bf16w, ref, atol=2e-2, rtol=2e-2), "bf16-weight mismatch"

    # 3) bf16 output path (the large-B, writeback-bound configuration).
    out_bf16o = jax.block_until_ready(
        time_embedding(t, w1, b1, w2, b2, n_channels,
                       out_dtype=jnp.bfloat16))
    assert out_bf16o.dtype == jnp.bfloat16
    assert jnp.allclose(out_bf16o.astype(jnp.float32), ref,
                        atol=2e-2, rtol=2e-2), "bf16-out mismatch"

    # 4) Ragged batch (B not a multiple of 8) exercises the partial-block path
    #    (no wrapper padding, no post-call slice).
    t_odd = t[:5]
    ref_odd = reference_time_embedding(t_odd, w1, b1, w2, b2, n_channels)
    out_odd = jax.block_until_ready(
        time_embedding(t_odd, w1, b1, w2, b2, n_channels))
    assert out_odd.shape == (5, n_channels)
    assert jnp.allclose(out_odd, ref_odd, atol=2e-4, rtol=2e-4), "ragged mismatch"

    # 5) Multi-block grid with a partial tail block (B=20, TB=8 -> 3 blocks).
    t20 = jax.random.uniform(jax.random.PRNGKey(1), (20,), jnp.float32,
                             minval=0.0, maxval=1000.0)
    ref20 = reference_time_embedding(t20, w1, b1, w2, b2, n_channels)
    out20 = jax.block_until_ready(
        time_embedding(t20, w1, b1, w2, b2, n_channels, max_block_b=8))
    assert out20.shape == (20, n_channels)
    assert jnp.allclose(out20, ref20, atol=2e-4, rtol=2e-4), "multi-block mismatch"

    # TODO(synk): the remaining big win is architectural — fuse this embedding
    # into its consumer (ResBlock time-emb projection) or batch all sampling
    # timesteps into one call; not expressible inside this standalone kernel.

    print("KERNEL_OK")
</pallas_src>

<mosaic_0001>
module attributes {stable_mosaic.version = 11 : i64} {
  func.func @_time_embedding_kernel(%arg0: i32, %arg1: memref<8x1xf32, #tpu.memory_space<vmem>>, %arg2: memref<32x128xf32, #tpu.memory_space<vmem>>, %arg3: memref<1x128xf32, #tpu.memory_space<vmem>>, %arg4: memref<128x128xf32, #tpu.memory_space<vmem>>, %arg5: memref<1x128xf32, #tpu.memory_space<vmem>>, %arg6: memref<8x128xf32, #tpu.memory_space<vmem>>) attributes {dimension_semantics = [#tpu.dimension_semantics<parallel>], iteration_bounds = array<i64: 1>, scalar_prefetch = 0 : i64, scratch_operands = 0 : i64, tpu.core_type = #tpu.core_type<tc>, window_params = [{transform_indices = @transform_0, window_bounds = array<i64: 8, 1>}, {pipeline_mode = #tpu.pipeline_mode<synchronous>, transform_indices = @transform_1, window_bounds = array<i64: 32, 128>}, {pipeline_mode = #tpu.pipeline_mode<synchronous>, transform_indices = @transform_2, window_bounds = array<i64: 1, 128>}, {pipeline_mode = #tpu.pipeline_mode<synchronous>, transform_indices = @transform_3, window_bounds = array<i64: 128, 128>}, {pipeline_mode = #tpu.pipeline_mode<synchronous>, transform_indices = @transform_4, window_bounds = array<i64: 1, 128>}, {transform_indices = @transform_5, window_bounds = array<i64: 8, 128>}]} {
    %c0 = arith.constant 0 : index
    %c0_0 = arith.constant 0 : index
    %0 = vector.load %arg1[%c0, %c0_0] : memref<8x1xf32, #tpu.memory_space<vmem>>, vector<8x1xf32>
    %1 = tpu.iota {dimensions = array<i32: 1>} : vector<1x32xi32>
    %c16_i32 = arith.constant 16 : i32
    %2 = vector.broadcast %c16_i32 : i32 to vector<1x32xi32>
    %3 = arith.cmpi slt, %1, %2 : vector<1x32xi32>
    %c16_i32_1 = arith.constant 16 : i32
    %4 = vector.broadcast %c16_i32_1 : i32 to vector<1x32xi32>
    %5 = arith.subi %1, %4 : vector<1x32xi32>
    %6 = arith.select %3, %1, %5 : vector<1x32xi1>, vector<1x32xi32>
    %7 = arith.sitofp %6 : vector<1x32xi32> to vector<1x32xf32>
    %cst = arith.constant -0.614022672 : f32
    %8 = vector.broadcast %cst : f32 to vector<1x32xf32>
    %9 = arith.mulf %7, %8 : vector<1x32xf32>
    %10 = math.exp %9 : vector<1x32xf32>
    %cst_2 = arith.constant 0.000000e+00 : f32
    %cst_3 = arith.constant 1.57079637 : f32
    %11 = vector.broadcast %cst_2 : f32 to vector<1x32xf32>
    %12 = vector.broadcast %cst_3 : f32 to vector<1x32xf32>
    %13 = arith.select %3, %11, %12 : vector<1x32xi1>, vector<1x32xf32>
    %14 = vector.broadcast %0 : vector<8x1xf32> to vector<8x32xf32>
    %15 = vector.broadcast %10 : vector<1x32xf32> to vector<8x32xf32>
    %16 = arith.mulf %14, %15 : vector<8x32xf32>
    %17 = vector.broadcast %13 : vector<1x32xf32> to vector<8x32xf32>
    %18 = arith.addf %16, %17 : vector<8x32xf32>
    %19 = math.sin %18 : vector<8x32xf32>
    %c0_4 = arith.constant 0 : index
    %c0_5 = arith.constant 0 : index
    %20 = vector.load %arg2[%c0_4, %c0_5] : memref<32x128xf32, #tpu.memory_space<vmem>>, vector<32x128xf32>
    %cst_6 = arith.constant dense<0.000000e+00> : vector<8x128xf32>
    %21 = tpu.matmul %19, %20, %cst_6 {dimension_numbers = #tpu.dot_dimension_numbers<[1], [0], [0], [1], [0, 0, 1, 1], [], []>} : vector<8x32xf32>, vector<32x128xf32>, vector<8x128xf32> -> vector<8x128xf32>
    %c0_7 = arith.constant 0 : index
    %c0_8 = arith.constant 0 : index
    %22 = vector.load %arg3[%c0_7, %c0_8] : memref<1x128xf32, #tpu.memory_space<vmem>>, vector<1x128xf32>
    %23 = vector.broadcast %22 : vector<1x128xf32> to vector<8x128xf32>
    %24 = arith.addf %21, %23 : vector<8x128xf32>
    %cst_9 = arith.constant 5.000000e-01 : f32
    %25 = vector.broadcast %cst_9 : f32 to vector<8x128xf32>
    %26 = arith.mulf %25, %24 : vector<8x128xf32>
    %27 = math.tanh %26 : vector<8x128xf32>
    %cst_10 = arith.constant 1.000000e+00 : f32
    %28 = vector.broadcast %cst_10 : f32 to vector<8x128xf32>
    %29 = arith.addf %27, %28 : vector<8x128xf32>
    %cst_11 = arith.constant 5.000000e-01 : f32
    %30 = vector.broadcast %cst_11 : f32 to vector<8x128xf32>
    %31 = arith.mulf %30, %29 : vector<8x128xf32>
    %32 = arith.mulf %24, %31 : vector<8x128xf32>
    %c0_12 = arith.constant 0 : index
    %c0_13 = arith.constant 0 : index
    %33 = vector.load %arg4[%c0_12, %c0_13] : memref<128x128xf32, #tpu.memory_space<vmem>>, vector<128x128xf32>
    %cst_14 = arith.constant dense<0.000000e+00> : vector<8x128xf32>
    %34 = tpu.matmul %32, %33, %cst_14 {dimension_numbers = #tpu.dot_dimension_numbers<[1], [0], [0], [1], [0, 0, 1, 1], [], []>} : vector<8x128xf32>, vector<128x128xf32>, vector<8x128xf32> -> vector<8x128xf32>
    %c0_15 = arith.constant 0 : index
    %c0_16 = arith.constant 0 : index
    %35 = vector.load %arg5[%c0_15, %c0_16] : memref<1x128xf32, #tpu.memory_space<vmem>>, vector<1x128xf32>
    %36 = vector.broadcast %35 : vector<1x128xf32> to vector<8x128xf32>
    %37 = arith.addf %34, %36 : vector<8x128xf32>
    %c0_17 = arith.constant 0 : index
    %c0_18 = arith.constant 0 : index
    %38 = vector.load %arg6[%c0_17, %c0_18] : memref<8x128xf32, #tpu.memory_space<vmem>>, vector<8x128xf32>
    tpu.vector_store %arg6[%c0_17, %c0_18], %37 {strides = array<i32>} : memref<8x128xf32, #tpu.memory_space<vmem>>, vector<8x128xf32>,
    return
  }
  func.func @transform_0(%arg0: i32) -> (i32, i32) {
    %c0_i32 = arith.constant 0 : i32
    %c0_i32_0 = arith.constant 0 : i32
    return %arg0, %c0_i32 : i32, i32
  }
  func.func @transform_1(%arg0: i32) -> (i32, i32) {
    %c0_i32 = arith.constant 0 : i32
    %c0_i32_0 = arith.constant 0 : i32
    %c0_i32_1 = arith.constant 0 : i32
    return %c0_i32, %c0_i32_0 : i32, i32
  }
  func.func @transform_2(%arg0: i32) -> (i32, i32) {
    %c0_i32 = arith.constant 0 : i32
    %c0_i32_0 = arith.constant 0 : i32
    %c0_i32_1 = arith.constant 0 : i32
    return %c0_i32, %c0_i32_0 : i32, i32
  }
  func.func @transform_3(%arg0: i32) -> (i32, i32) {
    %c0_i32 = arith.constant 0 : i32
    %c0_i32_0 = arith.constant 0 : i32
    %c0_i32_1 = arith.constant 0 : i32
    return %c0_i32, %c0_i32_0 : i32, i32
  }
  func.func @transform_4(%arg0: i32) -> (i32, i32) {
    %c0_i32 = arith.constant 0 : i32
    %c0_i32_0 = arith.constant 0 : i32
    %c0_i32_1 = arith.constant 0 : i32
    return %c0_i32, %c0_i32_0 : i32, i32
  }
  func.func @transform_5(%arg0: i32) -> (i32, i32) {
    %c0_i32 = arith.constant 0 : i32
    %c0_i32_0 = arith.constant 0 : i32
    return %arg0, %c0_i32 : i32, i32
  }
}

</mosaic_0001>

<llo_original>
// kernel: tpu_custom_call.1
$region0: #{tpu_custom_call.1}
  #allocation0 [shape = 'u32[]', space=smem, size = 0x4, offset = 0x4, fixed_abs, tag = 'smem constant byte address 0x4 - core index']
  #allocation1 [shape = 'u32[144,128]{1,0:T(1,128)}', space=vmem, size = 0x12000, scoped, tag = 'internal scratch']
  %s0 = inlined_call_operand.vmem [shape: f32[8,1], index: 0, kind: input, shape index: {}]
  %s1 = inlined_call_operand.hbm [shape: f32[32,128], index: 1, kind: input, shape index: {}]
  %s2 = inlined_call_operand.vmem [shape: f32[1,128], index: 2, kind: input, shape index: {}]
  %s3 = inlined_call_operand.hbm [shape: f32[128,128], index: 3, kind: input, shape index: {}]
  %s4 = inlined_call_operand.vmem [shape: f32[1,128], index: 4, kind: input, shape index: {}]
  %s5 = inlined_call_operand.hbm [shape: f32[8,128], index: 5, kind: output, shape index: {}]
  %s6 = sld [smem:[#allocation0]]
  $region38: #{tpu_custom_call.1} parent=0
    _
  %s8 = ssub.s32 1, %s6
  %s9 = scalar_select 0, %s8, %s6
  $region1: #{tpu_custom_call.1} parent=0
    #allocation2 [shape = 'u8[16384]{0}', space=vmem, size = 0x4000, scoped, tag = 'input window, operand 1, single buffered']
    #allocation3 [shape = 's32[1]{0}', space=sflag, size = 0x4, scoped, tag = 'scoped memory for tpu_custom_call.1']
    #allocation4 [shape = 's32[1]{0}', space=sflag, size = 0x4, scoped, tag = 'scoped memory for tpu_custom_call.1']
    #allocation5 [shape = 'u8[65536]{0}', space=vmem, size = 0x10000, scoped, tag = 'input window, operand 3, single buffered']
    #allocation6 [shape = 's32[1]{0}', space=sflag, size = 0x4, scoped, tag = 'scoped memory for tpu_custom_call.1']
    #allocation7 [shape = 'u8[4096]{0}', space=vmem, size = 0x1000, scoped, tag = 'output window, operand 0, single buffered']
    %10 = vsyncpa [#allocation3], 0
    %11 = vsyncpa [#allocation6], 0
    %12 = vsyncpa [#allocation4], 0
    // Predicated region
    $region2: #{tpu_custom_call.1} parent=1 // pred_check
      _
    $region3: #{tpu_custom_call.1} parent=1 // pred_check_branch
      %14 = sbr.rel (0) target = $region5
    $region4: #{tpu_custom_call.1} parent=1 // pred_region
      _
    $region5: #{tpu_custom_call.1} parent=1 // pred_fallthru
      _
    // Predicated region
    $region6: #{tpu_custom_call.1} parent=1 // pred_check
      _
    $region7: #{tpu_custom_call.1} parent=1 // pred_check_branch
      %16 = sbr.rel (0) target = $region9
    $region8: #{tpu_custom_call.1} parent=1 // pred_region
      %s18 = ssub.s32 512, 512
      %19 = vsyncadd [#allocation3], %s18
      %s20 = sshll.u32 [#allocation2], 4
      %s21 = int_to_ptr.vmem [resolvable:$true] %s20
      %26 = dma.hbm_to_vmem [thread:$0]  %s1, 512, %s21, [#allocation3], 128, 128, 8
    $region9: #{tpu_custom_call.1} parent=1 // pred_fallthru
      _
    // Predicated region
    $region10: #{tpu_custom_call.1} parent=1 // pred_check
      _
    $region11: #{tpu_custom_call.1} parent=1 // pred_check_branch
      %28 = sbr.rel (0) target = $region13
    $region12: #{tpu_custom_call.1} parent=1 // pred_region
      _
    $region13: #{tpu_custom_call.1} parent=1 // pred_fallthru
      _
    // Predicated region
    $region14: #{tpu_custom_call.1} parent=1 // pred_check
      _
    $region15: #{tpu_custom_call.1} parent=1 // pred_check_branch
      %30 = sbr.rel (0) target = $region17
    $region16: #{tpu_custom_call.1} parent=1 // pred_region
      %s32 = ssub.s32 2048, 2048
      %33 = vsyncadd [#allocation6], %s32
      %s34 = sshll.u32 [#allocation5], 4
      %s35 = int_to_ptr.vmem [resolvable:$true] %s34
      %40 = dma.hbm_to_vmem [thread:$0]  %s3, 2048, %s35, [#allocation6], 128, 128, 8
    $region17: #{tpu_custom_call.1} parent=1 // pred_fallthru
      _
    // Predicated region
    $region18: #{tpu_custom_call.1} parent=1 // pred_check
      _
    $region19: #{tpu_custom_call.1} parent=1 // pred_check_branch
      %42 = sbr.rel (0) target = $region21
    $region20: #{tpu_custom_call.1} parent=1 // pred_region
      _
    $region21: #{tpu_custom_call.1} parent=1 // pred_fallthru
      _
    // Predicated region
    $region22: #{tpu_custom_call.1} parent=1 // pred_check
      _
    $region23: #{tpu_custom_call.1} parent=1 // pred_check_branch
      %44 = sbr.rel (0) target = $region25
    $region24: #{tpu_custom_call.1} parent=1 // pred_region
      %45 = dma.done [#allocation3], 512
    $region25: #{tpu_custom_call.1} parent=1 // pred_fallthru
      _
    // Predicated region
    $region26: #{tpu_custom_call.1} parent=1 // pred_check
      _
    $region27: #{tpu_custom_call.1} parent=1 // pred_check_branch
      %47 = sbr.rel (0) target = $region29
    $region28: #{tpu_custom_call.1} parent=1 // pred_region
      %48 = dma.done [#allocation6], 2048
    $region29: #{tpu_custom_call.1} parent=1 // pred_fallthru
      _
    %v49 = vld [vmem:[%s0] sm:$0xff]
    %v50 = vlaneseq
    %v51 = vand.u32 %v50, 127
    %vm52 = vcmp.lt.s32.totalorder %v51, 16
    %v53 = vsub.s32 %v51, 16
    %v54 = vsel %vm52, %v51, %v53
    %v55 = vcvt.s32.f32 %v54
    %v56 = vmul.f32 %v55, -0.6140227
    %v57 = vmul.f32 %v56, 1.442695
    %v58 = vpow.pop %v57
    %v59 = vsel %vm52, 0.0, 1.5707964
    %61 = vset.pattern.permute.xlu0 0
    %62 = vperm.xlu0 %61, %v49
    %v63 = vpop.permute.xlu0 %62
    %v65 = vmul.f32 %v63, %v58
    %v66 = vadd.f32 %v65, %v59
    %v67 = vand.u32 2147483647, %v66
    %vm68 = vcmp.le.f32.partialorder %v67, 0.7853982
    %vm69 = vcmp.lt.s32.totalorder %v66, 0
    %v70 = vand.u32 %v66, 2139095040
    %v71 = vshrl.u32 %v70, 23
    %v72 = vsub.s32 %v71, 127
    %v73 = vand.u32 2147483647, %v66
    %v74 = vand.u32 %v73, 8388607
    %v75 = vor.u32 %v74, 8388608
    %v76 = vsub.s32 0, %v75
    %v77 = vadd.s32 %v72, 1
    %vm78 = vcmp.gt.s32.totalorder %v77, 0
    %v79 = vsel %vm78, %v77, 0
    %v80 = vshrl.u32 %v79, 5
    %v81 = vand.u32 %v79, 31
    %v82 = vsub.s32 32, %v81
    %v83 = vshrl.u32 683565275, %v82
    %v84 = vshll.u32 683565275, %v81
    %v85 = vshrl.u32 2475754826, %v82
    %v86 = vor.u32 %v84, %v85
    %v87 = vshll.u32 2475754826, %v81
    %v88 = vshrl.u32 2131351028, %v82
    %v89 = vor.u32 %v87, %v88
    %v90 = vshll.u32 2131351028, %v81
    %v91 = vshrl.u32 2102212464, %v82
    %v92 = vor.u32 %v90, %v91
    %v93 = vshll.u32 2102212464, %v81
    %v94 = vshrl.u32 920167782, %v82
    %v95 = vor.u32 %v93, %v94
    %v96 = vshll.u32 920167782, %v81
    %v97 = vshrl.u32 1326507024, %v82
    %v98 = vor.u32 %v96, %v97
    %vm99 = vcmp.lt.s32.totalorder %v80, 1
    %vm100 = vcmp.lt.s32.totalorder %v80, 2
    %vm101 = vcmp.lt.s32.totalorder %v80, 3
    %vm102 = vcmp.lt.s32.totalorder %v80, 4
    %v103 = vsel %vm99, %v83, %v86
    %v104 = vsel %vm102, %v92, 2102212464
    %v105 = vsel %vm101, %v89, %v104
    %v106 = vsel %vm100, %v103, %v105
    %v107 = vsel %vm99, %v86, %v89
    %v108 = vsel %vm102, %v95, 920167782
    %v109 = vsel %vm101, %v92, %v108
    %v110 = vsel %vm100, %v107, %v109
    %v111 = vsel %vm99, %v89, %v92
    %v112 = vsel %vm102, %v98, 1326507024
    %v113 = vsel %vm101, %v95, %v112
    %v114 = vsel %vm100, %v111, %v113
    %v115 = vshll.u32 %v75, 8
    %v116 = vmul.u32.u64.compose %v115, %v114
    %v117 = vextract.low.u32 %v116
    %v118 = vextract.high.u32 %v116
    %v119 = vmul.u32.u64.compose %v115, %v110
    %v120 = vextract.low.u32 %v119
    %v121 = vextract.high.u32 %v119
    %v122 = vmul.u32 %v115, %v106
    %v123 = vadd.s32 %v118, %v120
    %vm124 = vc.u32 %v118, %v120
    %v125 = vadd.s32 %v121, 1
    %v126 = vsel %vm124, %v125, %v121
    %v127 = vadd.s32 %v122, %v126
    %v128 = vadd.s32 %v127, 536870912
    %v129 = vshrl.u32 %v128, 30
    %v130 = vshll.u32 %v129, 30
    %v131 = vsub.s32 %v127, %v130
    %vm132 = vcmp.lt.s32.totalorder %v131, 0
    %v133 = vsub.s32 0, %v131
    %v134 = vsel %vm132, %v133, %v131
    %v135 = vclz %v134
    %v136 = vsub.s32 %v135, 2
    %vm137 = vcmp.gt.s32.totalorder 0, %v136
    %v138 = vsel %vm137, 0, %v136
    %v139 = vsub.s32 32, %v138
    %v140 = vshll.u32 %v131, %v138
    %v141 = vshrl.u32 %v123, %v139
    %v142 = vor.u32 %v140, %v141
    %v143 = vsub.s32 4294967266, %v138
    %v144 = vadd.s32 %v143, 127
    %v145 = vshll.u32 %v144, 23
    %v146 = vor.u32 4788187, %v145
    %v147 = vand.u32 2147483647, %v146
    %v149 = vcvt.s32.f32 %v142
    %v150 = vmul.f32 %v149, %v147
    %v151 = vxor.u32 %v150, 2147483648
    %v152 = vsel %vm69, %v151, %v150
    %v153 = vsub.s32 4, %v129
    %v154 = vsel %vm69, %v153, %v129
    %v155 = vsel %vm68, %v66, %v152
    %v156 = vsel %vm68, 0, %v154
    %v157 = vcosq.f32.pop %v155
    %v158 = vsinq.f32.pop %v155
    %vm159 = vweird.f32 %v66
    %v160 = vadd.s32 %v156, 3
    %v161 = vand.u32 %v160, 3
    %vm162 = vcmp.lt.s32.totalorder %v161, 2
    %vm163 = vcmp.eq.s32.totalorder %v161, 0
    %v164 = vxor.u32 %v158, 2147483648
    %v165 = vsel %vm163, %v157, %v164
    %vm166 = vcmp.eq.s32.totalorder %v161, 2
    %v167 = vxor.u32 %v157, 2147483648
    %v168 = vsel %vm166, %v167, %v158
    %v169 = vsel %vm162, %v165, %v168
    %v170 = vsel %vm159, nan, %v169
    %v171 = vld [vmem:[#allocation2] sm:$0xff]
    %v172 = vld [vmem:[#allocation2 + $0x8] sm:$0xff]
    %v173 = vld [vmem:[#allocation2 + $0x10] sm:$0xff]
    %v174 = vld [vmem:[#allocation2 + $0x18] sm:$0xff]
    %v175 = vld [vmem:[%s2] sm:$0x1]
    %v177 = vlaneseq
    %v178 = vshrl.u32 %v177, 7
    %v179 = vsub.s32 0, %v178
    %v180 = vrot.slane %v175, %v179
    %vm182 = vcmask 261120
    %v184 = vsel %vm182, %v170, 0
    %186 = vmatprep.subr.mxu0 0.0
    %187 = vmatpush1.msra.mxu0 %v171
    %188 = vmatprep.subr.mxu0 0.0
    %189 = vmatpush1.msra.mxu0 %v172
    %190 = vmatprep.subr.mxu0 0.0
    %191 = vmatpush1.msra.mxu0 %v173
    %192 = vmatprep.subr.mxu0 0.0
    %193 = vmatpush1.msra.mxu0 %v174
    %194 = vmatprep.subr.mxu0 0.0
    %195 = vmatpush1.msra.mxu0 0.0
    %196 = vmatprep.subr.mxu0 0.0
    %197 = vmatpush1.msra.mxu0 0.0
    %198 = vmatprep.subr.mxu0 0.0
    %199 = vmatpush1.msra.mxu0 0.0
    %200 = vmatprep.subr.mxu0 0.0
    %201 = vmatpush1.msra.mxu0 0.0
    %202 = vmatprep.subr.mxu0 0.0
    %203 = vmatpush1.msra.mxu0 0.0
    %204 = vmatprep.subr.mxu0 0.0
    %205 = vmatpush1.msra.mxu0 0.0
    %206 = vmatprep.subr.mxu0 0.0
    %207 = vmatpush1.msra.mxu0 0.0
    %208 = vmatprep.subr.mxu0 0.0
    %209 = vmatpush1.msra.mxu0 0.0
    %210 = vmatprep.subr.mxu0 0.0
    %211 = vmatpush1.msra.mxu0 0.0
    %212 = vmatprep.subr.mxu0 0.0
    %213 = vmatpush1.msra.mxu0 0.0
    %214 = vmatprep.subr.mxu0 0.0
    %215 = vmatpush1.msra.mxu0 0.0
    %216 = vmatprep.subr.mxu0 0.0
    %217 = vmatpush1.msra.mxu0 0.0
    %218 = vmatprep.subr.mxu0 0.0
    %219 = vmatpush1.msra.mxu0 0.0
    %220 = vmatprep.subr.mxu0 0.0
    %221 = vmatpush1.msra.mxu0 0.0
    %222 = vmatprep.subr.mxu0 0.0
    %223 = vmatpush1.msra.mxu0 0.0
    %224 = vmatprep.subr.mxu0 0.0
    %225 = vmatpush1.msra.mxu0 0.0
    %226 = vmatprep.subr.mxu0 0.0
    %227 = vmatpush1.msra.mxu0 0.0
    %228 = vmatprep.subr.mxu0 0.0
    %229 = vmatpush1.msra.mxu0 0.0
    %230 = vmatprep.subr.mxu0 0.0
    %231 = vmatpush1.msra.mxu0 0.0
    %232 = vmatprep.subr.mxu0 0.0
    %233 = vmatpush1.msra.mxu0 0.0
    %234 = vmatprep.subr.mxu0 0.0
    %235 = vmatpush1.msra.mxu0 0.0
    %236 = vmatprep.subr.mxu0 0.0
    %237 = vmatpush1.msra.mxu0 0.0
    %238 = vmatprep.subr.mxu0 0.0
    %239 = vmatpush1.msra.mxu0 0.0
    %240 = vmatprep.subr.mxu0 0.0
    %241 = vmatpush1.msra.mxu0 0.0
    %242 = vmatprep.subr.mxu0 0.0
    %243 = vmatpush1.msra.mxu0 0.0
    %244 = vmatprep.subr.mxu0 0.0
    %245 = vmatpush1.msra.mxu0 0.0
    %246 = vmatprep.subr.mxu0 0.0
    %247 = vmatpush1.msra.mxu0 0.0
    %248 = vmatprep.subr.mxu0 0.0
    %249 = vmatpush1.msra.mxu0 0.0
    %250 = vmatprep.mubr.f32.mxu0 0.0
    %251 = vmatmul.mubr.f32.gmra.mrb[0].mxu0 %v184
    %v252 = vpop.f32.mrb[0].mxu0
    %v253 = vadd.f32 %v180, %v252
    %v254 = vpop.f32.mrb[0].mxu0
    %255 = vdwg.mxu0
    %v256 = vmul.f32 %v253, 0.5
    %v257 = vtanh.pop %v256
    %v258 = vadd.f32 %v257, 1.0
    %v259 = vmul.f32 %v258, 0.5
    %v260 = vmul.f32 %v253, %v259
    %v261 = vld [vmem:[#allocation5] sm:$0xff]
    %v262 = vld [vmem:[#allocation5 + $0x8] sm:$0xff]
    %v263 = vld [vmem:[#allocation5 + $0x10] sm:$0xff]
    %v264 = vld [vmem:[#allocation5 + $0x18] sm:$0xff]
    %v265 = vld [vmem:[#allocation5 + $0x20] sm:$0xff]
    %v266 = vld [vmem:[#allocation5 + $0x28] sm:$0xff]
    %v267 = vld [vmem:[#allocation5 + $0x30] sm:$0xff]
    %v268 = vld [vmem:[#allocation5 + $0x38] sm:$0xff]
    %v269 = vld [vmem:[#allocation5 + $0x40] sm:$0xff]
    %v270 = vld [vmem:[#allocation5 + $0x48] sm:$0xff]
    %v271 = vld [vmem:[#allocation5 + $0x50] sm:$0xff]
    %v272 = vld [vmem:[#allocation5 + $0x58] sm:$0xff]
    %v273 = vld [vmem:[#allocation5 + $0x60] sm:$0xff]
    %v274 = vld [vmem:[#allocation5 + $0x68] sm:$0xff]
    %v275 = vld [vmem:[#allocation5 + $0x70] sm:$0xff]
    %v276 = vld [vmem:[#allocation5 + $0x78] sm:$0xff]
    %v277 = vld [vmem:[%s4] sm:$0x1]
    %v279 = vlaneseq
    %v280 = vshrl.u32 %v279, 7
    %v281 = vsub.s32 0, %v280
    %v282 = vrot.slane %v277, %v281
    %284 = vmatprep.subr.mxu0 0.0
    %285 = vmatpush1.msra.mxu0 %v261
    %286 = vmatprep.subr.mxu0 0.0
    %287 = vmatpush1.msra.mxu0 %v262
    %288 = vmatprep.subr.mxu0 0.0
    %289 = vmatpush1.msra.mxu0 %v263
    %290 = vmatprep.subr.mxu0 0.0
    %291 = vmatpush1.msra.mxu0 %v264
    %292 = vmatprep.subr.mxu0 0.0
    %293 = vmatpush1.msra.mxu0 %v265
    %294 = vmatprep.subr.mxu0 0.0
    %295 = vmatpush1.msra.mxu0 %v266
    %296 = vmatprep.subr.mxu0 0.0
    %297 = vmatpush1.msra.mxu0 %v267
    %298 = vmatprep.subr.mxu0 0.0
    %299 = vmatpush1.msra.mxu0 %v268
    %300 = vmatprep.subr.mxu0 0.0
    %301 = vmatpush1.msra.mxu0 %v269
    %302 = vmatprep.subr.mxu0 0.0
    %303 = vmatpush1.msra.mxu0 %v270
    %304 = vmatprep.subr.mxu0 0.0
    %305 = vmatpush1.msra.mxu0 %v271
    %306 = vmatprep.subr.mxu0 0.0
    %307 = vmatpush1.msra.mxu0 %v272
    %308 = vmatprep.subr.mxu0 0.0
    %309 = vmatpush1.msra.mxu0 %v273
    %310 = vmatprep.subr.mxu0 0.0
    %311 = vmatpush1.msra.mxu0 %v274
    %312 = vmatprep.subr.mxu0 0.0
    %313 = vmatpush1.msra.mxu0 %v275
    %314 = vmatprep.subr.mxu0 0.0
    %315 = vmatpush1.msra.mxu0 %v276
    %316 = vmatprep.subr.mxu0 0.0
    %317 = vmatpush1.msra.mxu0 0.0
    %318 = vmatprep.subr.mxu0 0.0
    %319 = vmatpush1.msra.mxu0 0.0
    %320 = vmatprep.subr.mxu0 0.0
    %321 = vmatpush1.msra.mxu0 0.0
    %322 = vmatprep.subr.mxu0 0.0
    %323 = vmatpush1.msra.mxu0 0.0
    %324 = vmatprep.subr.mxu0 0.0
    %325 = vmatpush1.msra.mxu0 0.0
    %326 = vmatprep.subr.mxu0 0.0
    %327 = vmatpush1.msra.mxu0 0.0
    %328 = vmatprep.subr.mxu0 0.0
    %329 = vmatpush1.msra.mxu0 0.0
    %330 = vmatprep.subr.mxu0 0.0
    %331 = vmatpush1.msra.mxu0 0.0
    %332 = vmatprep.subr.mxu0 0.0
    %333 = vmatpush1.msra.mxu0 0.0
    %334 = vmatprep.subr.mxu0 0.0
    %335 = vmatpush1.msra.mxu0 0.0
    %336 = vmatprep.subr.mxu0 0.0
    %337 = vmatpush1.msra.mxu0 0.0
    %338 = vmatprep.subr.mxu0 0.0
    %339 = vmatpush1.msra.mxu0 0.0
    %340 = vmatprep.subr.mxu0 0.0
    %341 = vmatpush1.msra.mxu0 0.0
    %342 = vmatprep.subr.mxu0 0.0
    %343 = vmatpush1.msra.mxu0 0.0
    %344 = vmatprep.subr.mxu0 0.0
    %345 = vmatpush1.msra.mxu0 0.0
    %346 = vmatprep.subr.mxu0 0.0
    %347 = vmatpush1.msra.mxu0 0.0
    %348 = vmatprep.mubr.f32.mxu0 0.0
    %349 = vmatmul.mubr.f32.gmra.mrb[0].mxu0 %v260
    %v350 = vpop.f32.mrb[0].mxu0
    %v351 = vadd.f32 %v282, %v350
    %v352 = vpop.f32.mrb[0].mxu0
    %353 = vdwg.mxu0
    %354 = vst [vmem:[#allocation7] sm:$0xff] %v351
    // Predicated region
    $region30: #{tpu_custom_call.1} parent=1 // pred_check
      _
    $region31: #{tpu_custom_call.1} parent=1 // pred_check_branch
      %356 = sbr.rel (0) target = $region33
    $region32: #{tpu_custom_call.1} parent=1 // pred_region
      %s358 = ssub.s32 128, 128
      %359 = vsyncadd [#allocation4], %s358
      %s361 = sshll.u32 [#allocation7], 4
      %s362 = int_to_ptr.vmem [resolvable:$true] %s361
      %364 = dma.vmem_to_hbm [thread:$0]  %s362, 128, %s5, [#allocation4]
    $region33: #{tpu_custom_call.1} parent=1 // pred_fallthru
      _
    // Predicated region
    $region34: #{tpu_custom_call.1} parent=1 // pred_check
      _
    $region35: #{tpu_custom_call.1} parent=1 // pred_check_branch
      %366 = sbr.rel (0) target = $region37
    $region36: #{tpu_custom_call.1} parent=1 // pred_region
      %367 = dma.done [#allocation4], 128
    $region37: #{tpu_custom_call.1} parent=1 // pred_fallthru
      _
    %368 = vsyncpa [#allocation3], 1
    %369 = vsyncpa [#allocation6], 1
    %370 = vsyncpa [#allocation4], 1

</llo_original>
